<compile_context>
chip_gen: v7x
topology: tpu7x:2x2x1
jax: 0.10.0
libtpu: 0.0.40
codegen_flags: <defaults>
</compile_context>

<pallas_src>
import math

import jax
import jax.numpy as jnp
import numpy as np
from jax.experimental import pallas as pl
from jax.experimental.pallas import tpu as pltpu

_LANE = 128


def _round_up(x, m):
    return ((x + m - 1) // m) * m


def _grsm_kernel(W_ref, U_ref, dsumT_ref, P_ref, nnz_ref):
    """One R-tile: Gumbel-softmax P + single MXU contraction into nnz_ref.

    nnz_ref (resident accumulator output):
      rows [0, num_part)  -> nnz_ch_ba flattened over lanes
      row   num_part      -> sum_r P   (for num_row_ch)
    The empty-row mask is folded into dsumT by the wrapper; P is masked in the
    fused wrapper epilogue.
    """
    eps = 1e-10
    # --- training-mode Gumbel-Softmax (soft sample), temperature = 1 ---
    u = U_ref[...]
    g = -jnp.log(eps - jnp.log(u + eps))              # sample_gumbel_like
    logits = W_ref[...] + g
    m = jnp.max(logits, axis=-1, keepdims=True)
    e = jnp.exp(logits - m)
    denom = jnp.sum(e, axis=-1, keepdims=True)
    # TODO(synk): pl.reciprocal(approx=True) saves VALU refinement cycles but
    # needs the 1e-4 validation tolerance relaxed; keep the exact form here.
    p = e * pl.reciprocal(denom, approx=False)
    P_ref[...] = p                                    # lane-dense, unmasked store

    # Single MXU matmul replaces the old per-part XLU loop:
    #   nnz[part, :]     = sum_r dsum[r, part] * P[r, :]
    #   nnz[num_part, :] = sum_r P[r, :]   (ones row folded into dsumT)
    @pl.when(pl.program_id(0) == 0)
    def _():
        nnz_ref[...] = jnp.zeros_like(nnz_ref)

    nnz_ref[...] += jnp.dot(
        dsumT_ref[...], p,
        precision=jax.lax.Precision.HIGHEST,
        preferred_element_type=jnp.float32)


def make_grad_row_register_size_forward(D, CH, BA, reg_size):
    """Builds a jitted forward(W, U, i) mirroring grad_row_register_size_model.

    All __init__-time (D-derived) preprocessing is hoisted here and done once.
    """
    f32 = jnp.float32
    D = jnp.asarray(D, f32)
    R, C = D.shape
    KB = CH * BA
    num_part = (C - 1) // reg_size + 1

    # ---- module constants (hoisted __init__ preprocessing) ----
    pad_c = num_part * reg_size - C
    D_pad = jnp.concatenate([D, jnp.zeros((R, pad_c), f32)], axis=1) if pad_c else D
    D_ = D_pad.reshape(R, num_part, reg_size)
    dsum = jnp.sum(D_, axis=-1)                            # (R, num_part)
    mask = (jnp.sum(D, axis=1) != 0).astype(f32)           # (R,)
    mask3 = mask.reshape(R, 1, 1)
    num_col_ch = jnp.full((CH,), float(C), f32)

    # ---- tiling ----
    LANEW = _round_up(KB, _LANE)                   # lane-dense last dim
    TILE_R = _round_up(R, 8) if R <= 256 else 256  # multiple of 8 (and of 128 if >1 tile)
    R_pad = _round_up(R, TILE_R)
    grid = (R_pad // TILE_R,)
    NPP = _round_up(num_part + 1, 8)               # sublane-padded contraction rows

    # dsumT: (NPP, R_pad); row num_part = ones (rowsum); row mask folded in;
    # padded rows/cols are zero so they contribute nothing.
    dsum_aug = jnp.concatenate([dsum, jnp.ones((R, 1), f32)], axis=1) * mask[:, None]
    dsumT = jnp.zeros((NPP, R_pad), f32).at[:num_part + 1, :R].set(dsum_aug.T)

    # ---- pallas_call plumbing ----
    grid_spec = pltpu.PrefetchScalarGridSpec(
        num_scalar_prefetch=0,
        grid=grid,
        in_specs=[
            pl.BlockSpec((TILE_R, LANEW), lambda r: (r, 0)),   # W (padded)
            pl.BlockSpec((TILE_R, LANEW), lambda r: (r, 0)),   # U (padded)
            pl.BlockSpec((NPP, TILE_R), lambda r: (0, r)),     # dsumT
        ],
        out_specs=(
            pl.BlockSpec((TILE_R, LANEW), lambda r: (r, 0)),   # P (flat)
            pl.BlockSpec((NPP, LANEW), lambda r: (0, 0)),      # resident nnz accumulator
        ),
    )
    out_shape = (
        jax.ShapeDtypeStruct((R_pad, LANEW), f32),
        jax.ShapeDtypeStruct((NPP, LANEW), f32),
    )

    # Explicit VMEM budget: double-buffered W/U/P tiles + dsumT + resident nnz.
    tile_bytes = 4 * TILE_R * LANEW
    vmem_need = (2 * 2 * tile_bytes + 2 * tile_bytes
                 + 2 * 4 * NPP * TILE_R + 4 * 4 * NPP * LANEW)
    vmem_limit = int(min(max(2 * vmem_need, 4 << 20), 48 << 20))

    cost = pl.CostEstimate(
        flops=int(2 * NPP * R_pad * LANEW + 8 * R_pad * LANEW),
        transcendentals=int(3 * R_pad * LANEW),
        bytes_accessed=int(4 * (3 * R_pad * LANEW + NPP * R_pad + NPP * LANEW)),
    )

    kernel_call = pl.pallas_call(
        _grsm_kernel,
        out_shape=out_shape,
        grid_spec=grid_spec,
        compiler_params=pltpu.CompilerParams(
            dimension_semantics=("arbitrary",),   # nnz accumulator is resident over R
            vmem_limit_bytes=vmem_limit,
        ),
        cost_estimate=cost,
    )

    @jax.jit
    def forward(W, U, i):
        # Computed as in the PyTorch forward; unused because GumbelSoftmax.forward
        # hard-codes temperature=1.
        temp = 1000.0 - 999.0 / 9999.0 * i
        del temp

        W32 = W.astype(f32)
        U32 = U.astype(f32)
        if R_pad == R and LANEW == KB:
            Wp, Up = W32, U32
        else:
            # Pad lanes with a large finite negative (padded lanes contribute
            # exactly 0 to the softmax, no inf-inf/NaN); pad uniforms with 0.5.
            Wp = jnp.full((R_pad, LANEW), -1e30, f32).at[:R, :KB].set(W32)
            Up = jnp.full((R_pad, LANEW), 0.5, f32).at[:R, :KB].set(U32)

        P_flat, nnz_acc = kernel_call(Wp, Up, dsumT)

        # ---- tiny derived reductions: fused into this jit, single dispatch ----
        P = P_flat[:R, :KB].reshape(R, CH, BA) * mask3
        nnz_ch_ba = nnz_acc[:num_part, :KB].reshape(num_part, CH, BA)
        num_row_ch = jnp.sum(nnz_acc[num_part, :KB].reshape(CH, BA), axis=1)
        max_nnz_ch = jnp.max(nnz_ch_ba, axis=2)
        tot_max_nnz_ch = jnp.sum(max_nnz_ch, axis=0)
        cost_ch = tot_max_nnz_ch + num_col_ch + num_row_ch
        max_cost = jnp.max(cost_ch)
        return (P, max_cost, cost_ch, max_nnz_ch, nnz_ch_ba,
                num_col_ch, num_row_ch, tot_max_nnz_ch)

    return forward


def reference_forward(W, U, D, CH, BA, reg_size):
    """Pure-JAX reference mirroring the PyTorch forward (training mode, soft)."""
    R, C = D.shape
    num_part = (C - 1) // reg_size + 1
    pad = num_part * reg_size - C
    D_pad = jnp.concatenate([D, jnp.zeros((R, pad), D.dtype)], axis=1) if pad else D
    D_ = D_pad.reshape(R, num_part, reg_size)
    mask = (jnp.sum(D, axis=1) != 0).astype(jnp.float32).reshape(R, 1, 1)

    eps = 1e-10
    g = -jnp.log(eps - jnp.log(U + eps))
    P = jax.nn.softmax(W + g, axis=-1).reshape(R, CH, BA) * mask
    x = P.reshape(R, 1, 1, CH, BA) * D_.reshape(R, num_part, reg_size, 1, 1)
    nnz_ch_ba = jnp.sum(x, axis=(0, 2))
    max_nnz_ch = jnp.max(nnz_ch_ba, axis=2)
    tot_max_nnz_ch = jnp.sum(max_nnz_ch, axis=0)
    num_col_ch = jnp.full((CH,), float(C), jnp.float32)
    num_row_ch = jnp.sum(P, axis=(0, 2))
    cost_ch = tot_max_nnz_ch + num_col_ch + num_row_ch
    max_cost = jnp.max(cost_ch)
    return (P, max_cost, cost_ch, max_nnz_ch, nnz_ch_ba,
            num_col_ch, num_row_ch, tot_max_nnz_ch)


if __name__ == "__main__":
    def run_case(R, C, CH, BA, reg_size, seed):
        key = jax.random.PRNGKey(seed)
        k_w, k_u, k_d = jax.random.split(key, 3)
        # W ~ kaiming_uniform_ (a=0, fan_in = CH*BA)
        fan_in = CH * BA
        bound = math.sqrt(6.0 / fan_in)
        W = jax.random.uniform(k_w, (R, CH * BA), jnp.float32, -bound, bound)
        # Deterministic uniform noise standing in for torch.rand in sample_gumbel_like.
        U = jax.random.uniform(k_u, (R, CH * BA), jnp.float32)
        # Sparsity pattern D (0/1); force one empty row to exercise the mask.
        D = (jax.random.uniform(k_d, (R, C)) < 0.3).astype(jnp.float32)
        D = D.at[min(3, R - 1), :].set(0.0)

        fwd = make_grad_row_register_size_forward(D, CH, BA, reg_size)
        outs = jax.block_until_ready(fwd(W, U, 100.0))
        ref = reference_forward(W, U, D, CH, BA, reg_size)
        names = ["P", "max_cost", "cost_ch", "max_nnz_ch", "nnz_ch_ba",
                 "num_col_ch", "num_row_ch", "tot_max_nnz_ch"]
        for n, a, b in zip(names, outs, ref):
            np.testing.assert_allclose(np.asarray(a), np.asarray(b),
                                       rtol=1e-4, atol=1e-4, err_msg=n)

    # Toy module shape (single grid step, fully resident): num_part = 3.
    run_case(R=8, C=16, CH=4, BA=8, reg_size=6, seed=0)
    # Larger R: exercises the R-tiled grid + resident nnz accumulator (2 steps).
    run_case(R=300, C=40, CH=4, BA=8, reg_size=7, seed=1)
    print("KERNEL_OK")
</pallas_src>

<mosaic_0001>
module attributes {stable_mosaic.version = 11 : i64} {
  func.func @_grsm_kernel(%arg0: i32, %arg1: memref<8x128xf32, #tpu.memory_space<vmem>>, %arg2: memref<8x128xf32, #tpu.memory_space<vmem>>, %arg3: memref<8x8xf32, #tpu.memory_space<vmem>>, %arg4: memref<8x128xf32, #tpu.memory_space<vmem>>, %arg5: memref<8x128xf32, #tpu.memory_space<vmem>>) attributes {dimension_semantics = [#tpu.dimension_semantics<arbitrary>], iteration_bounds = array<i64: 1>, scalar_prefetch = 0 : i64, scratch_operands = 0 : i64, tpu.core_type = #tpu.core_type<tc>, window_params = [{transform_indices = @transform_0, window_bounds = array<i64: 8, 128>}, {transform_indices = @transform_1, window_bounds = array<i64: 8, 128>}, {transform_indices = @transform_2, window_bounds = array<i64: 8, 8>}, {transform_indices = @transform_3, window_bounds = array<i64: 8, 128>}, {pipeline_mode = #tpu.pipeline_mode<synchronous>, transform_indices = @transform_4, window_bounds = array<i64: 8, 128>}]} {
    %c0 = arith.constant 0 : index
    %c0_0 = arith.constant 0 : index
    %0 = vector.load %arg2[%c0, %c0_0] : memref<8x128xf32, #tpu.memory_space<vmem>>, vector<8x128xf32>
    %cst = arith.constant 1.000000e-10 : f32
    %1 = vector.broadcast %cst : f32 to vector<8x128xf32>
    %2 = arith.addf %0, %1 : vector<8x128xf32>
    %3 = math.log %2 : vector<8x128xf32>
    %cst_1 = arith.constant 1.000000e-10 : f32
    %4 = vector.broadcast %cst_1 : f32 to vector<8x128xf32>
    %5 = arith.subf %4, %3 : vector<8x128xf32>
    %6 = math.log %5 : vector<8x128xf32>
    %cst_2 = arith.constant 0.000000e+00 : f32
    %7 = vector.broadcast %cst_2 : f32 to vector<8x128xf32>
    %8 = arith.subf %7, %6 : vector<8x128xf32>
    %c0_3 = arith.constant 0 : index
    %c0_4 = arith.constant 0 : index
    %9 = vector.load %arg1[%c0_3, %c0_4] : memref<8x128xf32, #tpu.memory_space<vmem>>, vector<8x128xf32>
    %10 = arith.addf %9, %8 : vector<8x128xf32>
    %cst_5 = arith.constant dense<0xFF800000> : vector<8xf32>
    %11 = vector.multi_reduction <maximumf>, %10, %cst_5 [1] : vector<8x128xf32> to vector<8xf32>
    %12 = vector.shape_cast %11 : vector<8xf32> to vector<8x1xf32>
    %13 = vector.broadcast %12 : vector<8x1xf32> to vector<8x128xf32>
    %14 = arith.subf %10, %13 : vector<8x128xf32>
    %15 = math.exp %14 : vector<8x128xf32>
    %cst_6 = arith.constant dense<0.000000e+00> : vector<8xf32>
    %16 = vector.multi_reduction <add>, %15, %cst_6 [1] : vector<8x128xf32> to vector<8xf32>
    %17 = vector.shape_cast %16 : vector<8xf32> to vector<8x1xf32>
    %18 = tpu.reciprocal %17 : vector<8x1xf32> -> vector<8x1xf32>
    %19 = vector.broadcast %18 : vector<8x1xf32> to vector<8x128xf32>
    %20 = arith.mulf %15, %19 : vector<8x128xf32>
    %c0_7 = arith.constant 0 : index
    %c0_8 = arith.constant 0 : index
    %21 = vector.load %arg4[%c0_7, %c0_8] : memref<8x128xf32, #tpu.memory_space<vmem>>, vector<8x128xf32>
    tpu.vector_store %arg4[%c0_7, %c0_8], %20 {strides = array<i32>} : memref<8x128xf32, #tpu.memory_space<vmem>>, vector<8x128xf32>,
    %c0_i32 = arith.constant 0 : i32
    %22 = arith.cmpi eq, %arg0, %c0_i32 : i32
    %23 = arith.extui %22 : i1 to i32
    %c0_i32_9 = arith.constant 0 : i32
    %24 = arith.cmpi ne, %23, %c0_i32_9 : i32
    scf.if %24 {
      %cst_17 = arith.constant 0.000000e+00 : f32
      %30 = vector.broadcast %cst_17 : f32 to vector<8x128xf32>
      %c0_18 = arith.constant 0 : index
      %c0_19 = arith.constant 0 : index
      %31 = vector.load %arg5[%c0_18, %c0_19] : memref<8x128xf32, #tpu.memory_space<vmem>>, vector<8x128xf32>
      tpu.vector_store %arg5[%c0_18, %c0_19], %30 {strides = array<i32>} : memref<8x128xf32, #tpu.memory_space<vmem>>, vector<8x128xf32>,
    } else {
    }
    %c0_10 = arith.constant 0 : index
    %c0_11 = arith.constant 0 : index
    %25 = vector.load %arg5[%c0_10, %c0_11] : memref<8x128xf32, #tpu.memory_space<vmem>>, vector<8x128xf32>
    %c0_12 = arith.constant 0 : index
    %c0_13 = arith.constant 0 : index
    %26 = vector.load %arg3[%c0_12, %c0_13] : memref<8x8xf32, #tpu.memory_space<vmem>>, vector<8x8xf32>
    %cst_14 = arith.constant dense<0.000000e+00> : vector<8x128xf32>
    %27 = tpu.matmul %26, %20, %cst_14 {dimension_numbers = #tpu.dot_dimension_numbers<[1], [0], [0], [1], [0, 0, 1, 1], [], []>, precision = #tpu.contract_precision<fp32>} : vector<8x8xf32>, vector<8x128xf32>, vector<8x128xf32> -> vector<8x128xf32>
    %28 = arith.addf %25, %27 : vector<8x128xf32>
    %c0_15 = arith.constant 0 : index
    %c0_16 = arith.constant 0 : index
    %29 = vector.load %arg5[%c0_15, %c0_16] : memref<8x128xf32, #tpu.memory_space<vmem>>, vector<8x128xf32>
    tpu.vector_store %arg5[%c0_15, %c0_16], %28 {strides = array<i32>} : memref<8x128xf32, #tpu.memory_space<vmem>>, vector<8x128xf32>,
    return
  }
  func.func @transform_0(%arg0: i32) -> (i32, i32) {
    %c0_i32 = arith.constant 0 : i32
    %c0_i32_0 = arith.constant 0 : i32
    return %arg0, %c0_i32 : i32, i32
  }
  func.func @transform_1(%arg0: i32) -> (i32, i32) {
    %c0_i32 = arith.constant 0 : i32
    %c0_i32_0 = arith.constant 0 : i32
    return %arg0, %c0_i32 : i32, i32
  }
  func.func @transform_2(%arg0: i32) -> (i32, i32) {
    %c0_i32 = arith.constant 0 : i32
    %c0_i32_0 = arith.constant 0 : i32
    return %c0_i32, %arg0 : i32, i32
  }
  func.func @transform_3(%arg0: i32) -> (i32, i32) {
    %c0_i32 = arith.constant 0 : i32
    %c0_i32_0 = arith.constant 0 : i32
    return %arg0, %c0_i32 : i32, i32
  }
  func.func @transform_4(%arg0: i32) -> (i32, i32) {
    %c0_i32 = arith.constant 0 : i32
    %c0_i32_0 = arith.constant 0 : i32
    %c0_i32_1 = arith.constant 0 : i32
    return %c0_i32, %c0_i32_0 : i32, i32
  }
}

</mosaic_0001>

<llo_original>
// kernel: squeeze.1
$region0: #{squeeze.1}
  %s0 = inlined_call_operand.vmem [shape: f32[32], index: 0, kind: input, shape index: {}]
  %s1 = inlined_call_operand.vmem [shape: f32[4,8], index: 1, kind: output, shape index: {}]
  $region1: #{squeeze.1} parent=0
    #allocation0 [shape = 'u8[4096]{0}', space=vmem, size = 0x1000, scoped, tag = 'scoped mem for output reshape']
    #allocation1 [shape = 'u8[4096]{0}', space=vmem, size = 0x1000, scoped, tag = 'scoped mem for input reshape']
    %s3 = sshllo.u32 0, 1
    %v4 = vld [vmem:[%s0] sm:%s3]
    %5 = vst [vmem:[#allocation1] sm:%s3] %v4
    %v6 = vld [vmem:[#allocation1] sm:$0x1]
    %vm7 = vcmask 64512
    %8 = vst.msk [vmem:[#allocation0] sm:$0x1] %vm7, %v6
    %v9 = vld [vmem:[#allocation1] sm:$0x1]
    %10 = vrot.lane.b32.xlu0 %v9, 120
    %v11 = vpop.permute.xlu0 %10
    %vm12 = vcmask 64512
    %s13 = scalar_lea.vmem [#allocation0], 1
    %14 = vst.msk [vmem:[%s13] sm:$0x1] %vm12, %v11
    %v15 = vld [vmem:[#allocation1] sm:$0x1]
    %16 = vrot.lane.b32.xlu0 %v15, 112
    %v17 = vpop.permute.xlu0 %16
    %vm18 = vcmask 64512
    %s19 = scalar_lea.vmem [#allocation0], 2
    %20 = vst.msk [vmem:[%s19] sm:$0x1] %vm18, %v17
    %v21 = vld [vmem:[#allocation1] sm:$0x1]
    %22 = vrot.lane.b32.xlu0 %v21, 104
    %v23 = vpop.permute.xlu0 %22
    %vm24 = vcmask 64512
    %s25 = scalar_lea.vmem [#allocation0], 3
    %26 = vst.msk [vmem:[%s25] sm:$0x1] %vm24, %v23
    %s28 = sshllo.u32 0, 4
    %v30 = vld [vmem:[#allocation0] sm:%s28]
    %s31 = sshllo.u32 0, 4
    %32 = vst [vmem:[%s1] sm:%s31] %v30

// kernel: forward.1
$region0: #{forward.1}
  #allocation0 [shape = 'u32[]', space=smem, size = 0x4, offset = 0x4, fixed_abs, tag = 'smem constant byte address 0x4 - core index']
  #allocation1 [shape = 'u32[144,128]{1,0:T(1,128)}', space=vmem, size = 0x12000, scoped, tag = 'internal scratch']
  %s0 = inlined_call_operand.vmem [shape: f32[8,128], index: 0, kind: input, shape index: {}]
  %s1 = inlined_call_operand.vmem [shape: f32[8,128], index: 1, kind: input, shape index: {}]
  %s2 = inlined_call_operand.vmem [shape: f32[8,8], index: 2, kind: input, shape index: {}]
  %s3 = inlined_call_operand.vmem [shape: f32[8,128], index: 3, kind: output, shape index: {0}]
  %s4 = inlined_call_operand.vmem [shape: f32[8,128], index: 4, kind: output, shape index: {1}]
  %5 = xla_tuple %s3, %s4
  %s6 = sld [smem:[#allocation0]]
  $region34: #{forward.1} parent=0
    _
  %s8 = ssub.s32 1, %s6
  %s9 = scalar_select 0, %s8, %s6
  // Predicated region
  $region2: #{forward.1} parent=0 // pred_check
    _
  $region3: #{forward.1} parent=0 // pred_check_branch
    %11 = sbr.rel (0) target = $region5
  $region4: #{forward.1} parent=0 // pred_region
    _
  $region5: #{forward.1} parent=0 // pred_fallthru
    _
  // Predicated region
  $region6: #{forward.1} parent=0 // pred_check
    _
  $region7: #{forward.1} parent=0 // pred_check_branch
    %13 = sbr.rel (0) target = $region9
  $region8: #{forward.1} parent=0 // pred_region
    _
  $region9: #{forward.1} parent=0 // pred_fallthru
    _
  // Predicated region
  $region10: #{forward.1} parent=0 // pred_check
    _
  $region11: #{forward.1} parent=0 // pred_check_branch
    %15 = sbr.rel (0) target = $region13
  $region12: #{forward.1} parent=0 // pred_region
    _
  $region13: #{forward.1} parent=0 // pred_fallthru
    _
  %v16 = vld [vmem:[%s1] sm:$0xff]
  %v17 = vadd.f32 %v16, 1e-10
  %v18 = vlog2.pop %v17
  %v19 = vmul.f32 %v18, 0.6931472
  %v20 = vsub.f32 1e-10, %v19
  %v21 = vlog2.pop %v20
  %v22 = vmul.f32 %v21, 0.6931472
  %v23 = vsub.f32 0.0, %v22
  %v24 = vld [vmem:[%s0] sm:$0xff]
  %v25 = vadd.f32 %v24, %v23
  %26 = vmax.xlane.f32.xlu0 %v25
  %v27 = vpop.xlane.xlu0 %26
  %v28 = vsub.f32 %v25, %v27
  %v29 = vmul.f32 %v28, 1.442695
  %v30 = vpow.pop %v29
  %31 = vadd.xlane.f32.xlu0 %v30
  %v32 = vpop.xlane.xlu0 %31
  %v33 = vrcp.pop %v32
  %v34 = vmul.f32 %v30, %v33
  %35 = vst [vmem:[%s3] sm:$0xff] %v34
  %p36 = scmp.eq.s32.totalorder 0, 0
  // Predicated region
  $region14: #{forward.1} parent=0 // pred_check
    %p37 = pneg %p36
  $region15: #{forward.1} parent=0 // pred_check_branch
    %39 = sbr.rel (%p37) target = $region17
  $region16: #{forward.1} parent=0 // pred_region
    %40 = vst [vmem:[%s4] sm:$0xff] 0.0
  $region17: #{forward.1} parent=0 // pred_fallthru
    _
  %v41 = vld [vmem:[%s4] sm:$0xff]
  %v42 = vld [vmem:[%s2] sm:$0xff]
  %vm43 = vcmask 64512
  %v45 = vsel %vm43, %v42, 0
  %47 = vmatprep.subr.mxu0 0.0
  %v48 = vand.u32 %v34, 4294901760
  %49 = vmatpush1.msra.mxu0 %v48
  %50 = vmatprep.subr.mxu0 0.0
  %51 = vmatpush1.msra.mxu0 0.0
  %52 = vmatprep.subr.mxu0 0.0
  %53 = vmatpush1.msra.mxu0 0.0
  %54 = vmatprep.subr.mxu0 0.0
  %55 = vmatpush1.msra.mxu0 0.0
  %56 = vmatprep.subr.mxu0 0.0
  %57 = vmatpush1.msra.mxu0 0.0
  %58 = vmatprep.subr.mxu0 0.0
  %59 = vmatpush1.msra.mxu0 0.0
  %60 = vmatprep.subr.mxu0 0.0
  %61 = vmatpush1.msra.mxu0 0.0
  %62 = vmatprep.subr.mxu0 0.0
  %63 = vmatpush1.msra.mxu0 0.0
  %64 = vmatprep.subr.mxu0 0.0
  %65 = vmatpush1.msra.mxu0 0.0
  %66 = vmatprep.subr.mxu0 0.0
  %67 = vmatpush1.msra.mxu0 0.0
  %68 = vmatprep.subr.mxu0 0.0
  %69 = vmatpush1.msra.mxu0 0.0
  %70 = vmatprep.subr.mxu0 0.0
  %71 = vmatpush1.msra.mxu0 0.0
  %72 = vmatprep.subr.mxu0 0.0
  %73 = vmatpush1.msra.mxu0 0.0
  %74 = vmatprep.subr.mxu0 0.0
  %75 = vmatpush1.msra.mxu0 0.0
  %76 = vmatprep.subr.mxu0 0.0
  %77 = vmatpush1.msra.mxu0 0.0
  %78 = vmatprep.subr.mxu0 0.0
  %79 = vmatpush1.msra.mxu0 0.0
  %80 = vmatprep.subr.mxu0 0.0
  %81 = vmatpush1.msra.mxu0 0.0
  %82 = vmatprep.subr.mxu0 0.0
  %83 = vmatpush1.msra.mxu0 0.0
  %84 = vmatprep.subr.mxu0 0.0
  %85 = vmatpush1.msra.mxu0 0.0
  %86 = vmatprep.subr.mxu0 0.0
  %87 = vmatpush1.msra.mxu0 0.0
  %88 = vmatprep.subr.mxu0 0.0
  %89 = vmatpush1.msra.mxu0 0.0
  %90 = vmatprep.subr.mxu0 0.0
  %91 = vmatpush1.msra.mxu0 0.0
  %92 = vmatprep.subr.mxu0 0.0
  %93 = vmatpush1.msra.mxu0 0.0
  %94 = vmatprep.subr.mxu0 0.0
  %95 = vmatpush1.msra.mxu0 0.0
  %96 = vmatprep.subr.mxu0 0.0
  %97 = vmatpush1.msra.mxu0 0.0
  %98 = vmatprep.subr.mxu0 0.0
  %99 = vmatpush1.msra.mxu0 0.0
  %100 = vmatprep.subr.mxu0 0.0
  %101 = vmatpush1.msra.mxu0 0.0
  %102 = vmatprep.subr.mxu0 0.0
  %103 = vmatpush1.msra.mxu0 0.0
  %104 = vmatprep.subr.mxu0 0.0
  %105 = vmatpush1.msra.mxu0 0.0
  %106 = vmatprep.subr.mxu0 0.0
  %107 = vmatpush1.msra.mxu0 0.0
  %108 = vmatprep.subr.mxu0 0.0
  %109 = vmatpush1.msra.mxu0 0.0
  %110 = vmatprep.subr.mxu0 0.0
  %111 = vmatpush1.msra.mxu0 0.0
  %112 = vmatprep.mubr.f32.mxu0 0.0
  %v113 = vand.u32 %v45, 4294901760
  %v114 = vsub.f32 %v45, %v113
  %v115 = vand.u32 %v114, 4294901760
  %v116 = vsub.f32 %v114, %v115
  %v117 = vand.u32 %v116, 4294901760
  %118 = vmatmul.mubr.f32.gmra.mrb[0].mxu0 %v117
  %v119 = vpop.f32.mrb[0].mxu0
  %v120 = vadd.f32 0.0, %v119
  %v121 = vpop.f32.mrb[0].mxu0
  %122 = vdwg.mxu0
  %123 = vmatprep.subr.mxu0 0.0
  %v124 = vand.u32 %v34, 4294901760
  %v125 = vsub.f32 %v34, %v124
  %v126 = vand.u32 %v125, 4294901760
  %v127 = vsub.f32 %v125, %v126
  %v128 = vand.u32 %v127, 4294901760
  %129 = vmatpush1.msra.mxu0 %v128
  %130 = vmatprep.subr.mxu0 0.0
  %131 = vmatpush1.msra.mxu0 0.0
  %132 = vmatprep.subr.mxu0 0.0
  %133 = vmatpush1.msra.mxu0 0.0
  %134 = vmatprep.subr.mxu0 0.0
  %135 = vmatpush1.msra.mxu0 0.0
  %136 = vmatprep.subr.mxu0 0.0
  %137 = vmatpush1.msra.mxu0 0.0
  %138 = vmatprep.subr.mxu0 0.0
  %139 = vmatpush1.msra.mxu0 0.0
  %140 = vmatprep.subr.mxu0 0.0
  %141 = vmatpush1.msra.mxu0 0.0
  %142 = vmatprep.subr.mxu0 0.0
  %143 = vmatpush1.msra.mxu0 0.0
  %144 = vmatprep.subr.mxu0 0.0
  %145 = vmatpush1.msra.mxu0 0.0
  %146 = vmatprep.subr.mxu0 0.0
  %147 = vmatpush1.msra.mxu0 0.0
  %148 = vmatprep.subr.mxu0 0.0
  %149 = vmatpush1.msra.mxu0 0.0
  %150 = vmatprep.subr.mxu0 0.0
  %151 = vmatpush1.msra.mxu0 0.0
  %152 = vmatprep.subr.mxu0 0.0
  %153 = vmatpush1.msra.mxu0 0.0
  %154 = vmatprep.subr.mxu0 0.0
  %155 = vmatpush1.msra.mxu0 0.0
  %156 = vmatprep.subr.mxu0 0.0
  %157 = vmatpush1.msra.mxu0 0.0
  %158 = vmatprep.subr.mxu0 0.0
  %159 = vmatpush1.msra.mxu0 0.0
  %160 = vmatprep.subr.mxu0 0.0
  %161 = vmatpush1.msra.mxu0 0.0
  %162 = vmatprep.subr.mxu0 0.0
  %163 = vmatpush1.msra.mxu0 0.0
  %164 = vmatprep.subr.mxu0 0.0
  %165 = vmatpush1.msra.mxu0 0.0
  %166 = vmatprep.subr.mxu0 0.0
  %167 = vmatpush1.msra.mxu0 0.0
  %168 = vmatprep.subr.mxu0 0.0
  %169 = vmatpush1.msra.mxu0 0.0
  %170 = vmatprep.subr.mxu0 0.0
  %171 = vmatpush1.msra.mxu0 0.0
  %172 = vmatprep.subr.mxu0 0.0
  %173 = vmatpush1.msra.mxu0 0.0
  %174 = vmatprep.subr.mxu0 0.0
  %175 = vmatpush1.msra.mxu0 0.0
  %176 = vmatprep.subr.mxu0 0.0
  %177 = vmatpush1.msra.mxu0 0.0
  %178 = vmatprep.subr.mxu0 0.0
  %179 = vmatpush1.msra.mxu0 0.0
  %180 = vmatprep.subr.mxu0 0.0
  %181 = vmatpush1.msra.mxu0 0.0
  %182 = vmatprep.subr.mxu0 0.0
  %183 = vmatpush1.msra.mxu0 0.0
  %184 = vmatprep.subr.mxu0 0.0
  %185 = vmatpush1.msra.mxu0 0.0
  %186 = vmatprep.subr.mxu0 0.0
  %187 = vmatpush1.msra.mxu0 0.0
  %188 = vmatprep.subr.mxu0 0.0
  %189 = vmatpush1.msra.mxu0 0.0
  %190 = vmatprep.subr.mxu0 0.0
  %191 = vmatpush1.msra.mxu0 0.0
  %192 = vmatprep.mubr.f32.mxu0 0.0
  %v193 = vand.u32 %v45, 4294901760
  %194 = vmatmul.mubr.f32.gmra.mrb[0].mxu0 %v193
  %v195 = vpop.f32.mrb[0].mxu0
  %v196 = vadd.f32 %v120, %v195
  %v197 = vpop.f32.mrb[0].mxu0
  %198 = vdwg.mxu0
  %199 = vmatprep.subr.mxu0 0.0
  %v200 = vand.u32 %v34, 4294901760
  %v201 = vsub.f32 %v34, %v200
  %202 = vmatpush1.msra.mxu0 %v201
  %203 = vmatprep.subr.mxu0 0.0
  %204 = vmatpush1.msra.mxu0 0.0
  %205 = vmatprep.subr.mxu0 0.0
  %206 = vmatpush1.msra.mxu0 0.0
  %207 = vmatprep.subr.mxu0 0.0
  %208 = vmatpush1.msra.mxu0 0.0
  %209 = vmatprep.subr.mxu0 0.0
  %210 = vmatpush1.msra.mxu0 0.0
  %211 = vmatprep.subr.mxu0 0.0
  %212 = vmatpush1.msra.mxu0 0.0
  %213 = vmatprep.subr.mxu0 0.0
  %214 = vmatpush1.msra.mxu0 0.0
  %215 = vmatprep.subr.mxu0 0.0
  %216 = vmatpush1.msra.mxu0 0.0
  %217 = vmatprep.subr.mxu0 0.0
  %218 = vmatpush1.msra.mxu0 0.0
  %219 = vmatprep.subr.mxu0 0.0
  %220 = vmatpush1.msra.mxu0 0.0
  %221 = vmatprep.subr.mxu0 0.0
  %222 = vmatpush1.msra.mxu0 0.0
  %223 = vmatprep.subr.mxu0 0.0
  %224 = vmatpush1.msra.mxu0 0.0
  %225 = vmatprep.subr.mxu0 0.0
  %226 = vmatpush1.msra.mxu0 0.0
  %227 = vmatprep.subr.mxu0 0.0
  %228 = vmatpush1.msra.mxu0 0.0
  %229 = vmatprep.subr.mxu0 0.0
  %230 = vmatpush1.msra.mxu0 0.0
  %231 = vmatprep.subr.mxu0 0.0
  %232 = vmatpush1.msra.mxu0 0.0
  %233 = vmatprep.subr.mxu0 0.0
  %234 = vmatpush1.msra.mxu0 0.0
  %235 = vmatprep.subr.mxu0 0.0
  %236 = vmatpush1.msra.mxu0 0.0
  %237 = vmatprep.subr.mxu0 0.0
  %238 = vmatpush1.msra.mxu0 0.0
  %239 = vmatprep.subr.mxu0 0.0
  %240 = vmatpush1.msra.mxu0 0.0
  %241 = vmatprep.subr.mxu0 0.0
  %242 = vmatpush1.msra.mxu0 0.0
  %243 = vmatprep.subr.mxu0 0.0
  %244 = vmatpush1.msra.mxu0 0.0
  %245 = vmatprep.subr.mxu0 0.0
  %246 = vmatpush1.msra.mxu0 0.0
  %247 = vmatprep.subr.mxu0 0.0
  %248 = vmatpush1.msra.mxu0 0.0
  %249 = vmatprep.subr.mxu0 0.0
  %250 = vmatpush1.msra.mxu0 0.0
  %251 = vmatprep.subr.mxu0 0.0
  %252 = vmatpush1.msra.mxu0 0.0
  %253 = vmatprep.subr.mxu0 0.0
  %254 = vmatpush1.msra.mxu0 0.0
  %255 = vmatprep.subr.mxu0 0.0
  %256 = vmatpush1.msra.mxu0 0.0
  %257 = vmatprep.subr.mxu0 0.0
  %258 = vmatpush1.msra.mxu0 0.0
  %259 = vmatprep.subr.mxu0 0.0
  %260 = vmatpush1.msra.mxu0 0.0
  %261 = vmatprep.subr.mxu0 0.0
  %262 = vmatpush1.msra.mxu0 0.0
  %263 = vmatprep.subr.mxu0 0.0
  %264 = vmatpush1.msra.mxu0 0.0
  %265 = vmatprep.mubr.f32.mxu0 0.0
  %v266 = vand.u32 %v45, 4294901760
  %v267 = vsub.f32 %v45, %v266
  %268 = vmatmul.mubr.f32.gmra.mrb[0].mxu0 %v267
  %v269 = vpop.f32.mrb[0].mxu0
  %v270 = vadd.f32 %v196, %v269
  %v271 = vpop.f32.mrb[0].mxu0
  %272 = vdwg.mxu0
  %273 = vmatprep.subr.mxu0 0.0
  %v274 = vand.u32 %v34, 4294901760
  %275 = vmatpush1.msra.mxu0 %v274
  %276 = vmatprep.subr.mxu0 0.0
  %277 = vmatpush1.msra.mxu0 0.0
  %278 = vmatprep.subr.mxu0 0.0
  %279 = vmatpush1.msra.mxu0 0.0
  %280 = vmatprep.subr.mxu0 0.0
  %281 = vmatpush1.msra.mxu0 0.0
  %282 = vmatprep.subr.mxu0 0.0
  %283 = vmatpush1.msra.mxu0 0.0
  %284 = vmatprep.subr.mxu0 0.0
  %285 = vmatpush1.msra.mxu0 0.0
  %286 = vmatprep.subr.mxu0 0.0
  %287 = vmatpush1.msra.mxu0 0.0
  %288 = vmatprep.subr.mxu0 0.0
  %289 = vmatpush1.msra.mxu0 0.0
  %290 = vmatprep.subr.mxu0 0.0
  %291 = vmatpush1.msra.mxu0 0.0
  %292 = vmatprep.subr.mxu0 0.0
  %293 = vmatpush1.msra.mxu0 0.0
  %294 = vmatprep.subr.mxu0 0.0
  %295 = vmatpush1.msra.mxu0 0.0
  %296 = vmatprep.subr.mxu0 0.0
  %297 = vmatpush1.msra.mxu0 0.0
  %298 = vmatprep.subr.mxu0 0.0
  %299 = vmatpush1.msra.mxu0 0.0
  %300 = vmatprep.subr.mxu0 0.0
  %301 = vmatpush1.msra.mxu0 0.0
  %302 = vmatprep.subr.mxu0 0.0
  %303 = vmatpush1.msra.mxu0 0.0
  %304 = vmatprep.subr.mxu0 0.0
  %305 = vmatpush1.msra.mxu0 0.0
  %306 = vmatprep.subr.mxu0 0.0
  %307 = vmatpush1.msra.mxu0 0.0
  %308 = vmatprep.subr.mxu0 0.0
  %309 = vmatpush1.msra.mxu0 0.0
  %310 = vmatprep.subr.mxu0 0.0
  %311 = vmatpush1.msra.mxu0 0.0
  %312 = vmatprep.subr.mxu0 0.0
  %313 = vmatpush1.msra.mxu0 0.0
  %314 = vmatprep.subr.mxu0 0.0
  %315 = vmatpush1.msra.mxu0 0.0
  %316 = vmatprep.subr.mxu0 0.0
  %317 = vmatpush1.msra.mxu0 0.0
  %318 = vmatprep.subr.mxu0 0.0
  %319 = vmatpush1.msra.mxu0 0.0
  %320 = vmatprep.subr.mxu0 0.0
  %321 = vmatpush1.msra.mxu0 0.0
  %322 = vmatprep.subr.mxu0 0.0
  %323 = vmatpush1.msra.mxu0 0.0
  %324 = vmatprep.subr.mxu0 0.0
  %325 = vmatpush1.msra.mxu0 0.0
  %326 = vmatprep.subr.mxu0 0.0
  %327 = vmatpush1.msra.mxu0 0.0
  %328 = vmatprep.subr.mxu0 0.0
  %329 = vmatpush1.msra.mxu0 0.0
  %330 = vmatprep.subr.mxu0 0.0
  %331 = vmatpush1.msra.mxu0 0.0
  %332 = vmatprep.subr.mxu0 0.0
  %333 = vmatpush1.msra.mxu0 0.0
  %334 = vmatprep.subr.mxu0 0.0
  %335 = vmatpush1.msra.mxu0 0.0
  %336 = vmatprep.subr.mxu0 0.0
  %337 = vmatpush1.msra.mxu0 0.0
  %338 = vmatprep.mubr.f32.mxu0 0.0
  %v339 = vand.u32 %v45, 4294901760
  %v340 = vsub.f32 %v45, %v339
  %v341 = vand.u32 %v340, 4294901760
  %342 = vmatmul.mubr.f32.gmra.mrb[0].mxu0 %v341
  %v343 = vpop.f32.mrb[0].mxu0
  %v344 = vadd.f32 %v270, %v343
  %v345 = vpop.f32.mrb[0].mxu0
  %346 = vdwg.mxu0
  %347 = vmatprep.subr.mxu0 0.0
  %v348 = vand.u32 %v34, 4294901760
  %v349 = vsub.f32 %v34, %v348
  %v350 = vand.u32 %v349, 4294901760
  %351 = vmatpush1.msra.mxu0 %v350
  %352 = vmatprep.subr.mxu0 0.0
  %353 = vmatpush1.msra.mxu0 0.0
  %354 = vmatprep.subr.mxu0 0.0
  %355 = vmatpush1.msra.mxu0 0.0
  %356 = vmatprep.subr.mxu0 0.0
  %357 = vmatpush1.msra.mxu0 0.0
  %358 = vmatprep.subr.mxu0 0.0
  %359 = vmatpush1.msra.mxu0 0.0
  %360 = vmatprep.subr.mxu0 0.0
  %361 = vmatpush1.msra.mxu0 0.0
  %362 = vmatprep.subr.mxu0 0.0
  %363 = vmatpush1.msra.mxu0 0.0
  %364 = vmatprep.subr.mxu0 0.0
  %365 = vmatpush1.msra.mxu0 0.0
  %366 = vmatprep.subr.mxu0 0.0
  %367 = vmatpush1.msra.mxu0 0.0
  %368 = vmatprep.subr.mxu0 0.0
  %369 = vmatpush1.msra.mxu0 0.0
  %370 = vmatprep.subr.mxu0 0.0
  %371 = vmatpush1.msra.mxu0 0.0
  %372 = vmatprep.subr.mxu0 0.0
  %373 = vmatpush1.msra.mxu0 0.0
  %374 = vmatprep.subr.mxu0 0.0
  %375 = vmatpush1.msra.mxu0 0.0
  %376 = vmatprep.subr.mxu0 0.0
  %377 = vmatpush1.msra.mxu0 0.0
  %378 = vmatprep.subr.mxu0 0.0
  %379 = vmatpush1.msra.mxu0 0.0
  %380 = vmatprep.subr.mxu0 0.0
  %381 = vmatpush1.msra.mxu0 0.0
  %382 = vmatprep.subr.mxu0 0.0
  %383 = vmatpush1.msra.mxu0 0.0
  %384 = vmatprep.subr.mxu0 0.0
  %385 = vmatpush1.msra.mxu0 0.0
  %386 = vmatprep.subr.mxu0 0.0
  %387 = vmatpush1.msra.mxu0 0.0
  %388 = vmatprep.subr.mxu0 0.0
  %389 = vmatpush1.msra.mxu0 0.0
  %390 = vmatprep.subr.mxu0 0.0
  %391 = vmatpush1.msra.mxu0 0.0
  %392 = vmatprep.subr.mxu0 0.0
  %393 = vmatpush1.msra.mxu0 0.0
  %394 = vmatprep.subr.mxu0 0.0
  %395 = vmatpush1.msra.mxu0 0.0
  %396 = vmatprep.subr.mxu0 0.0
  %397 = vmatpush1.msra.mxu0 0.0
  %398 = vmatprep.subr.mxu0 0.0
  %399 = vmatpush1.msra.mxu0 0.0
  %400 = vmatprep.subr.mxu0 0.0
  %401 = vmatpush1.msra.mxu0 0.0
  %402 = vmatprep.subr.mxu0 0.0
  %403 = vmatpush1.msra.mxu0 0.0
  %404 = vmatprep.subr.mxu0 0.0
  %405 = vmatpush1.msra.mxu0 0.0
  %406 = vmatprep.subr.mxu0 0.0
  %407 = vmatpush1.msra.mxu0 0.0
  %408 = vmatprep.subr.mxu0 0.0
  %409 = vmatpush1.msra.mxu0 0.0
  %410 = vmatprep.subr.mxu0 0.0
  %411 = vmatpush1.msra.mxu0 0.0
  %412 = vmatprep.subr.mxu0 0.0
  %413 = vmatpush1.msra.mxu0 0.0
  %414 = vmatprep.mubr.f32.mxu0 0.0
  %v415 = vand.u32 %v45, 4294901760
  %416 = vmatmul.mubr.f32.gmra.mrb[0].mxu0 %v415
  %v417 = vpop.f32.mrb[0].mxu0
  %v418 = vadd.f32 %v344, %v417
  %v419 = vpop.f32.mrb[0].mxu0
  %420 = vdwg.mxu0
  %421 = vmatprep.subr.mxu0 0.0
  %v422 = vand.u32 %v34, 4294901760
  %423 = vmatpush1.msra.mxu0 %v422
  %424 = vmatprep.subr.mxu0 0.0
  %425 = vmatpush1.msra.mxu0 0.0
  %426 = vmatprep.subr.mxu0 0.0
  %427 = vmatpush1.msra.mxu0 0.0
  %428 = vmatprep.subr.mxu0 0.0
  %429 = vmatpush1.msra.mxu0 0.0
  %430 = vmatprep.subr.mxu0 0.0
  %431 = vmatpush1.msra.mxu0 0.0
  %432 = vmatprep.subr.mxu0 0.0
  %433 = vmatpush1.msra.mxu0 0.0
  %434 = vmatprep.subr.mxu0 0.0
  %435 = vmatpush1.msra.mxu0 0.0
  %436 = vmatprep.subr.mxu0 0.0
  %437 = vmatpush1.msra.mxu0 0.0
  %438 = vmatprep.subr.mxu0 0.0
  %439 = vmatpush1.msra.mxu0 0.0
  %440 = vmatprep.subr.mxu0 0.0
  %441 = vmatpush1.msra.mxu0 0.0
  %442 = vmatprep.subr.mxu0 0.0
  %443 = vmatpush1.msra.mxu0 0.0
  %444 = vmatprep.subr.mxu0 0.0
  %445 = vmatpush1.msra.mxu0 0.0
  %446 = vmatprep.subr.mxu0 0.0
  %447 = vmatpush1.msra.mxu0 0.0
  %448 = vmatprep.subr.mxu0 0.0
  %449 = vmatpush1.msra.mxu0 0.0
  %450 = vmatprep.subr.mxu0 0.0
  %451 = vmatpush1.msra.mxu0 0.0
  %452 = vmatprep.subr.mxu0 0.0
  %453 = vmatpush1.msra.mxu0 0.0
  %454 = vmatprep.subr.mxu0 0.0
  %455 = vmatpush1.msra.mxu0 0.0
  %456 = vmatprep.subr.mxu0 0.0
  %457 = vmatpush1.msra.mxu0 0.0
  %458 = vmatprep.subr.mxu0 0.0
  %459 = vmatpush1.msra.mxu0 0.0
  %460 = vmatprep.subr.mxu0 0.0
  %461 = vmatpush1.msra.mxu0 0.0
  %462 = vmatprep.subr.mxu0 0.0
  %463 = vmatpush1.msra.mxu0 0.0
  %464 = vmatprep.subr.mxu0 0.0
  %465 = vmatpush1.msra.mxu0 0.0
  %466 = vmatprep.subr.mxu0 0.0
  %467 = vmatpush1.msra.mxu0 0.0
  %468 = vmatprep.subr.mxu0 0.0
  %469 = vmatpush1.msra.mxu0 0.0
  %470 = vmatprep.subr.mxu0 0.0
  %471 = vmatpush1.msra.mxu0 0.0
  %472 = vmatprep.subr.mxu0 0.0
  %473 = vmatpush1.msra.mxu0 0.0
  %474 = vmatprep.subr.mxu0 0.0
  %475 = vmatpush1.msra.mxu0 0.0
  %476 = vmatprep.subr.mxu0 0.0
  %477 = vmatpush1.msra.mxu0 0.0
  %478 = vmatprep.subr.mxu0 0.0
  %479 = vmatpush1.msra.mxu0 0.0
  %480 = vmatprep.subr.mxu0 0.0
  %481 = vmatpush1.msra.mxu0 0.0
  %482 = vmatprep.subr.mxu0 0.0
  %483 = vmatpush1.msra.mxu0 0.0
  %484 = vmatprep.subr.mxu0 0.0
  %485 = vmatpush1.msra.mxu0 0.0
  %486 = vmatprep.mubr.f32.mxu0 0.0
  %v487 = vand.u32 %v45, 4294901760
  %488 = vmatmul.mubr.f32.gmra.mrb[0].mxu0 %v487
  %v489 = vpop.f32.mrb[0].mxu0
  %v490 = vadd.f32 %v418, %v489
  %v491 = vpop.f32.mrb[0].mxu0
  %492 = vdwg.mxu0
  %v493 = vadd.f32 %v41, %v490
  %494 = vst [vmem:[%s4] sm:$0xff] %v493
  // Predicated region
  $region18: #{forward.1} parent=0 // pred_check
    _
  $region19: #{forward.1} parent=0 // pred_check_branch
    %496 = sbr.rel (0) target = $region21
  $region20: #{forward.1} parent=0 // pred_region
    _
  $region21: #{forward.1} parent=0 // pred_fallthru
    _
  // Predicated region
  $region22: #{forward.1} parent=0 // pred_check
    _
  $region23: #{forward.1} parent=0 // pred_check_branch
    %498 = sbr.rel (0) target = $region25
  $region24: #{forward.1} parent=0 // pred_region
    _
  $region25: #{forward.1} parent=0 // pred_fallthru
    _
  // Predicated region
  $region26: #{forward.1} parent=0 // pred_check
    _
  $region27: #{forward.1} parent=0 // pred_check_branch
    %500 = sbr.rel (0) target = $region29
  $region28: #{forward.1} parent=0 // pred_region
    _
  $region29: #{forward.1} parent=0 // pred_fallthru
    _
  // Predicated region
  $region30: #{forward.1} parent=0 // pred_check
    _
  $region31: #{forward.1} parent=0 // pred_check_branch
    %502 = sbr.rel (0) target = $region33
  $region32: #{forward.1} parent=0 // pred_region
    _
  $region33: #{forward.1} parent=0 // pred_fallthru
    _

</llo_original>
